<compile_context>
chip_gen: v7x
topology: tpu7x:2x2x1
jax: 0.10.0
libtpu: 0.0.40
codegen_flags: <defaults>
</compile_context>

<pallas_src>
import jax
import jax.numpy as jnp
import numpy as np
from jax.experimental import pallas as pl
from jax.experimental.pallas import tpu as pltpu


# ---------------------------------------------------------------------------
# Small helpers
# ---------------------------------------------------------------------------

def _pick_cout_tile(cout):
    """Output-channel tile: a multiple of 128 (lane-dense stores) or full Cout."""
    if cout % 256 == 0:
        return 256
    if cout % 128 == 0:
        return 128
    return cout  # full dim always satisfies the (8,128) block rule


def _largest_divisor_leq(n, cap):
    cap = max(1, min(n, cap))
    for d in range(cap, 0, -1):
        if n % d == 0:
            return d
    return 1


def _vmem_limit(working_set_bytes):
    """Raise the scoped-VMEM cap only when needed; stay under v7x's 64 MiB."""
    need = int(2.5 * working_set_bytes) + (4 << 20)   # double-buffering + slack
    if need <= (32 << 20):
        return None                                   # default is enough
    return min(need, 56 << 20)


# ---------------------------------------------------------------------------
# Pallas kernels
# ---------------------------------------------------------------------------

def _conv3x3s2_kernel(x_ref, w_ref, b_ref, o_ref):
    """Fused-im2col 3x3 / stride-2 conv for one image x one Cout tile.

    x_ref: (Ho+1, 2, Wo+1, 2*Cin)  pair-merged, zero-padded activations
    w_ref: (3, 2, 2*Cin, Tco)      per (row-tap, col-pair-offset) GEMM weights
    b_ref: (1, Tco)
    o_ref: (Ho*Wo, Tco)
    """
    hp1, _, wp1, c2 = x_ref.shape
    ho, wo = hp1 - 1, wp1 - 1
    m, tco = o_ref.shape

    acc = jnp.zeros((m, tco), jnp.float32)
    for ki in range(3):                      # row tap
        pi, dri = ki % 2, ki // 2            # row parity / row-pair offset
        for dcj in range(2):                 # column-pair offset (kj in {0,1} / {2})
            tap = x_ref[dri:dri + ho, pi, dcj:dcj + wo, :]        # (Ho, Wo, 2C)
            tap2d = tap.reshape(m, c2)                            # (Ho*Wo, 2C)
            acc = acc + jnp.dot(tap2d, w_ref[ki, dcj],
                                preferred_element_type=jnp.float32)
    acc = acc + b_ref[...].astype(jnp.float32)
    o_ref[...] = acc.astype(o_ref.dtype)


def _avgpool2x2_kernel(x_ref, o_ref):
    """2x2 / stride-2 average pooling on a tile of output rows.

    x_ref: (Th, 2, Wo, 2*C)  pair-merged input rows for Th output rows
    o_ref: (Th, Wo, C)
    """
    c = o_ref.shape[-1]
    rows = (x_ref[:, 0, :, :].astype(jnp.float32)
            + x_ref[:, 1, :, :].astype(jnp.float32))              # (Th, Wo, 2C)
    out = (rows[:, :, :c] + rows[:, :, c:]) * 0.25
    o_ref[...] = out.astype(o_ref.dtype)


# ---------------------------------------------------------------------------
# Wrappers (layout glue only: NCHW<->NHWC, zero-pad, free reshapes)
# ---------------------------------------------------------------------------

def _conv2d_3x3_s2_pallas(x_nchw, w_oihw, bias, padding):
    N, C, H, W = x_nchw.shape
    Cout = w_oihw.shape[0]
    stride, k = 2, 3
    Ho = (H + 2 * padding - k) // stride + 1
    Wo = (W + 2 * padding - k) // stride + 1
    dtype = x_nchw.dtype
    itemsize = jnp.dtype(dtype).itemsize

    # NCHW -> NHWC, zero-pad so the padded extent is exactly (2*(Ho+1), 2*(Wo+1)).
    # The extra bottom/right rows beyond the conv's receptive field are never
    # multiplied by a nonzero weight.
    x = jnp.transpose(x_nchw, (0, 2, 3, 1))
    pad_h = 2 * (Ho + 1) - H - padding
    pad_w = 2 * (Wo + 1) - W - padding
    x = jnp.pad(x, ((0, 0), (padding, pad_h), (padding, pad_w), (0, 0)))
    # Free reshape: merge row pairs and column pairs.
    xr = x.reshape(N, Ho + 1, 2, Wo + 1, 2 * C)

    # Weights OIHW -> per (row-tap ki, col-pair offset) blocks of (2C, Cout):
    #   offset 0: kj in {0,1} (both halves of a column pair)
    #   offset 1: kj == 2 (first half of the next pair; second half zeroed)
    w_kkco = jnp.transpose(w_oihw, (2, 3, 1, 0))                   # (3,3,Cin,Cout)
    w_a = w_kkco[:, 0:2].reshape(3, 2 * C, Cout)
    w_b = jnp.concatenate(
        [w_kkco[:, 2], jnp.zeros((3, C, Cout), w_oihw.dtype)], axis=1)
    w_packed = jnp.stack([w_a, w_b], axis=1).astype(dtype)         # (3,2,2C,Cout)
    b2 = bias.reshape(1, Cout).astype(dtype)

    Tco = _pick_cout_tile(Cout)
    n_co = Cout // Tco
    M = Ho * Wo

    x_block_bytes = (Ho + 1) * 2 * (Wo + 1) * 2 * C * itemsize
    o_block_bytes = M * Tco * itemsize
    w_bytes = 3 * 2 * 2 * C * Tco * itemsize

    out = pl.pallas_call(
        _conv3x3s2_kernel,
        out_shape=jax.ShapeDtypeStruct((N, M, Cout), dtype),
        grid=(N, n_co),
        in_specs=[
            pl.BlockSpec((None, Ho + 1, 2, Wo + 1, 2 * C),
                         lambda n, co: (n, 0, 0, 0, 0)),
            pl.BlockSpec((3, 2, 2 * C, Tco), lambda n, co: (0, 0, 0, co)),
            pl.BlockSpec((1, Tco), lambda n, co: (0, co)),
        ],
        out_specs=pl.BlockSpec((None, M, Tco), lambda n, co: (n, 0, co)),
        compiler_params=pltpu.CompilerParams(
            dimension_semantics=("parallel", "parallel"),
            vmem_limit_bytes=_vmem_limit(x_block_bytes + o_block_bytes + w_bytes)),
    )(xr, w_packed, b2)

    out = out.reshape(N, Ho, Wo, Cout)
    return jnp.transpose(out, (0, 3, 1, 2))      # back to NCHW


def _avgpool2d_s2_pallas(x_nchw):
    N, C, H, W = x_nchw.shape
    Ho, Wo = H // 2, W // 2
    dtype = x_nchw.dtype
    itemsize = jnp.dtype(dtype).itemsize

    x = jnp.transpose(x_nchw, (0, 2, 3, 1))            # NHWC
    x = x[:, :2 * Ho, :2 * Wo, :]                      # floor behavior for odd H/W
    xr = x.reshape(N, Ho, 2, Wo, 2 * C)                # free pair-merge reshape

    # Row tile: keep the input slab per step small (good pipelining) while
    # dividing Ho evenly so no partial blocks are needed.
    row_bytes = 4 * Wo * C * itemsize                  # input slab per output row
    cap = max(1, (2 << 20) // max(row_bytes, 1))
    Th = _largest_divisor_leq(Ho, cap)

    in_block = Th * 2 * Wo * 2 * C * itemsize
    out_block = Th * Wo * C * itemsize

    out = pl.pallas_call(
        _avgpool2x2_kernel,
        out_shape=jax.ShapeDtypeStruct((N, Ho, Wo, C), dtype),
        grid=(N, Ho // Th),
        in_specs=[pl.BlockSpec((None, Th, 2, Wo, 2 * C),
                               lambda n, t: (n, t, 0, 0, 0))],
        out_specs=pl.BlockSpec((None, Th, Wo, C), lambda n, t: (n, t, 0, 0)),
        compiler_params=pltpu.CompilerParams(
            dimension_semantics=("parallel", "parallel"),
            vmem_limit_bytes=_vmem_limit(in_block + out_block)),
    )(xr)
    return jnp.transpose(out, (0, 3, 1, 2))            # back to NCHW


# ---------------------------------------------------------------------------
# Downsample module (JAX/Pallas port)
# ---------------------------------------------------------------------------

class Downsample:
    """Downsampling layer with an optional convolution (dims=2 only)."""

    def __init__(self, channels, use_conv, dims=2, out_channels=None, padding=1,
                 *, key=None):
        assert dims == 2, "only dims=2 implemented"  # TODO(synk): dims=1/3 paths
        self.channels = channels
        self.out_channels = out_channels or channels
        self.use_conv = use_conv
        self.padding = padding
        if use_conv:
            if key is None:
                key = jax.random.PRNGKey(0)
            kw_, kb_ = jax.random.split(key)
            fan_in = channels * 3 * 3
            bound = 1.0 / float(np.sqrt(fan_in))
            # Same shape as torch.nn.Conv2d: (out_channels, in_channels, 3, 3)
            self.weight = jax.random.uniform(
                kw_, (self.out_channels, channels, 3, 3), jnp.float32, -bound, bound)
            self.bias = jax.random.uniform(
                kb_, (self.out_channels,), jnp.float32, -bound, bound)
        else:
            assert self.channels == self.out_channels

    def __call__(self, x):
        assert x.shape[1] == self.channels
        if self.use_conv:
            return _conv2d_3x3_s2_pallas(x, self.weight, self.bias, self.padding)
        return _avgpool2d_s2_pallas(x)


# ---------------------------------------------------------------------------
# Demo / correctness check
# ---------------------------------------------------------------------------

if __name__ == "__main__":
    key = jax.random.PRNGKey(0)
    kx, kp = jax.random.split(key)
    x = jax.random.normal(kx, (2, 4, 16, 16), jnp.float32)  # NCHW, like PyTorch

    # --- conv path (use_conv=True) ---
    ds_conv = Downsample(channels=4, use_conv=True, dims=2, out_channels=4,
                         padding=1, key=kp)
    y_conv = jax.block_until_ready(ds_conv(x))
    assert y_conv.shape == (2, 4, 8, 8), y_conv.shape

    ref_conv = jax.lax.conv_general_dilated(
        x, ds_conv.weight, window_strides=(2, 2), padding=[(1, 1), (1, 1)],
        dimension_numbers=("NCHW", "OIHW", "NCHW"))
    ref_conv = ref_conv + ds_conv.bias.reshape(1, -1, 1, 1)
    np.testing.assert_allclose(np.asarray(y_conv), np.asarray(ref_conv),
                               rtol=1e-5, atol=1e-5)

    # --- avg-pool path (use_conv=False) ---
    ds_pool = Downsample(channels=4, use_conv=False, dims=2)
    y_pool = jax.block_until_ready(ds_pool(x))
    assert y_pool.shape == (2, 4, 8, 8), y_pool.shape

    ref_pool = jax.lax.reduce_window(
        x, 0.0, jax.lax.add, (1, 1, 2, 2), (1, 1, 2, 2), "VALID") / 4.0
    np.testing.assert_allclose(np.asarray(y_pool), np.asarray(ref_pool),
                               rtol=1e-5, atol=1e-5)

    print("KERNEL_OK")
</pallas_src>

<mosaic_0001>
module attributes {stable_mosaic.version = 11 : i64} {
  func.func @_conv3x3s2_kernel(%arg0: i32, %arg1: i32, %arg2: memref<1x9x2x9x8xf32, #tpu.memory_space<vmem>>, %arg3: memref<3x2x8x4xf32, #tpu.memory_space<vmem>>, %arg4: memref<1x4xf32, #tpu.memory_space<vmem>>, %arg5: memref<1x64x4xf32, #tpu.memory_space<vmem>>) attributes {dimension_semantics = [#tpu.dimension_semantics<parallel>, #tpu.dimension_semantics<parallel>], iteration_bounds = array<i64: 2, 1>, scalar_prefetch = 0 : i64, scratch_operands = 0 : i64, tpu.core_type = #tpu.core_type<tc>, window_params = [{transform_indices = @transform_0, window_bounds = array<i64: 1, 9, 2, 9, 8>}, {transform_indices = @transform_1, window_bounds = array<i64: 3, 2, 8, 4>}, {transform_indices = @transform_2, window_bounds = array<i64: 1, 4>}, {transform_indices = @transform_3, window_bounds = array<i64: 1, 64, 4>}]} {
    %cst = arith.constant 0.000000e+00 : f32
    %0 = vector.broadcast %cst : f32 to vector<64x4xf32>
    %c0 = arith.constant 0 : index
    %c0_0 = arith.constant 0 : index
    %c0_1 = arith.constant 0 : index
    %c0_2 = arith.constant 0 : index
    %c0_3 = arith.constant 0 : index
    %1 = vector.load %arg2[%c0, %c0_0, %c0_1, %c0_2, %c0_3] : memref<1x9x2x9x8xf32, #tpu.memory_space<vmem>>, vector<1x8x1x8x8xf32>
    %2 = vector.shape_cast %1 : vector<1x8x1x8x8xf32> to vector<8x8x8xf32>
    %3 = vector.shape_cast %2 : vector<8x8x8xf32> to vector<64x8xf32>
    %c0_4 = arith.constant 0 : index
    %c0_5 = arith.constant 0 : index
    %c0_6 = arith.constant 0 : index
    %c0_7 = arith.constant 0 : index
    %4 = vector.load %arg3[%c0_4, %c0_5, %c0_6, %c0_7] : memref<3x2x8x4xf32, #tpu.memory_space<vmem>>, vector<1x1x8x4xf32>
    %5 = vector.shape_cast %4 : vector<1x1x8x4xf32> to vector<8x4xf32>
    %cst_8 = arith.constant dense<0.000000e+00> : vector<64x4xf32>
    %6 = tpu.matmul %3, %5, %cst_8 {dimension_numbers = #tpu.dot_dimension_numbers<[1], [0], [0], [1], [0, 0, 1, 1], [], []>} : vector<64x8xf32>, vector<8x4xf32>, vector<64x4xf32> -> vector<64x4xf32>
    %7 = arith.addf %0, %6 : vector<64x4xf32>
    %c0_9 = arith.constant 0 : index
    %c0_10 = arith.constant 0 : index
    %c0_11 = arith.constant 0 : index
    %c1 = arith.constant 1 : index
    %c0_12 = arith.constant 0 : index
    %8 = vector.load %arg2[%c0_9, %c0_10, %c0_11, %c1, %c0_12] : memref<1x9x2x9x8xf32, #tpu.memory_space<vmem>>, vector<1x8x1x8x8xf32>
    %9 = vector.shape_cast %8 : vector<1x8x1x8x8xf32> to vector<8x8x8xf32>
    %10 = vector.shape_cast %9 : vector<8x8x8xf32> to vector<64x8xf32>
    %c0_13 = arith.constant 0 : index
    %c1_14 = arith.constant 1 : index
    %c0_15 = arith.constant 0 : index
    %c0_16 = arith.constant 0 : index
    %11 = vector.load %arg3[%c0_13, %c1_14, %c0_15, %c0_16] : memref<3x2x8x4xf32, #tpu.memory_space<vmem>>, vector<1x1x8x4xf32>
    %12 = vector.shape_cast %11 : vector<1x1x8x4xf32> to vector<8x4xf32>
    %cst_17 = arith.constant dense<0.000000e+00> : vector<64x4xf32>
    %13 = tpu.matmul %10, %12, %cst_17 {dimension_numbers = #tpu.dot_dimension_numbers<[1], [0], [0], [1], [0, 0, 1, 1], [], []>} : vector<64x8xf32>, vector<8x4xf32>, vector<64x4xf32> -> vector<64x4xf32>
    %14 = arith.addf %7, %13 : vector<64x4xf32>
    %c0_18 = arith.constant 0 : index
    %c0_19 = arith.constant 0 : index
    %c1_20 = arith.constant 1 : index
    %c0_21 = arith.constant 0 : index
    %c0_22 = arith.constant 0 : index
    %15 = vector.load %arg2[%c0_18, %c0_19, %c1_20, %c0_21, %c0_22] : memref<1x9x2x9x8xf32, #tpu.memory_space<vmem>>, vector<1x8x1x8x8xf32>
    %16 = vector.shape_cast %15 : vector<1x8x1x8x8xf32> to vector<8x8x8xf32>
    %17 = vector.shape_cast %16 : vector<8x8x8xf32> to vector<64x8xf32>
    %c1_23 = arith.constant 1 : index
    %c0_24 = arith.constant 0 : index
    %c0_25 = arith.constant 0 : index
    %c0_26 = arith.constant 0 : index
    %18 = vector.load %arg3[%c1_23, %c0_24, %c0_25, %c0_26] : memref<3x2x8x4xf32, #tpu.memory_space<vmem>>, vector<1x1x8x4xf32>
    %19 = vector.shape_cast %18 : vector<1x1x8x4xf32> to vector<8x4xf32>
    %cst_27 = arith.constant dense<0.000000e+00> : vector<64x4xf32>
    %20 = tpu.matmul %17, %19, %cst_27 {dimension_numbers = #tpu.dot_dimension_numbers<[1], [0], [0], [1], [0, 0, 1, 1], [], []>} : vector<64x8xf32>, vector<8x4xf32>, vector<64x4xf32> -> vector<64x4xf32>
    %21 = arith.addf %14, %20 : vector<64x4xf32>
    %c0_28 = arith.constant 0 : index
    %c0_29 = arith.constant 0 : index
    %c1_30 = arith.constant 1 : index
    %c1_31 = arith.constant 1 : index
    %c0_32 = arith.constant 0 : index
    %22 = vector.load %arg2[%c0_28, %c0_29, %c1_30, %c1_31, %c0_32] : memref<1x9x2x9x8xf32, #tpu.memory_space<vmem>>, vector<1x8x1x8x8xf32>
    %23 = vector.shape_cast %22 : vector<1x8x1x8x8xf32> to vector<8x8x8xf32>
    %24 = vector.shape_cast %23 : vector<8x8x8xf32> to vector<64x8xf32>
    %c1_33 = arith.constant 1 : index
    %c1_34 = arith.constant 1 : index
    %c0_35 = arith.constant 0 : index
    %c0_36 = arith.constant 0 : index
    %25 = vector.load %arg3[%c1_33, %c1_34, %c0_35, %c0_36] : memref<3x2x8x4xf32, #tpu.memory_space<vmem>>, vector<1x1x8x4xf32>
    %26 = vector.shape_cast %25 : vector<1x1x8x4xf32> to vector<8x4xf32>
    %cst_37 = arith.constant dense<0.000000e+00> : vector<64x4xf32>
    %27 = tpu.matmul %24, %26, %cst_37 {dimension_numbers = #tpu.dot_dimension_numbers<[1], [0], [0], [1], [0, 0, 1, 1], [], []>} : vector<64x8xf32>, vector<8x4xf32>, vector<64x4xf32> -> vector<64x4xf32>
    %28 = arith.addf %21, %27 : vector<64x4xf32>
    %c0_38 = arith.constant 0 : index
    %c1_39 = arith.constant 1 : index
    %c0_40 = arith.constant 0 : index
    %c0_41 = arith.constant 0 : index
    %c0_42 = arith.constant 0 : index
    %29 = vector.load %arg2[%c0_38, %c1_39, %c0_40, %c0_41, %c0_42] : memref<1x9x2x9x8xf32, #tpu.memory_space<vmem>>, vector<1x8x1x8x8xf32>
    %30 = vector.shape_cast %29 : vector<1x8x1x8x8xf32> to vector<8x8x8xf32>
    %31 = vector.shape_cast %30 : vector<8x8x8xf32> to vector<64x8xf32>
    %c2 = arith.constant 2 : index
    %c0_43 = arith.constant 0 : index
    %c0_44 = arith.constant 0 : index
    %c0_45 = arith.constant 0 : index
    %32 = vector.load %arg3[%c2, %c0_43, %c0_44, %c0_45] : memref<3x2x8x4xf32, #tpu.memory_space<vmem>>, vector<1x1x8x4xf32>
    %33 = vector.shape_cast %32 : vector<1x1x8x4xf32> to vector<8x4xf32>
    %cst_46 = arith.constant dense<0.000000e+00> : vector<64x4xf32>
    %34 = tpu.matmul %31, %33, %cst_46 {dimension_numbers = #tpu.dot_dimension_numbers<[1], [0], [0], [1], [0, 0, 1, 1], [], []>} : vector<64x8xf32>, vector<8x4xf32>, vector<64x4xf32> -> vector<64x4xf32>
    %35 = arith.addf %28, %34 : vector<64x4xf32>
    %c0_47 = arith.constant 0 : index
    %c1_48 = arith.constant 1 : index
    %c0_49 = arith.constant 0 : index
    %c1_50 = arith.constant 1 : index
    %c0_51 = arith.constant 0 : index
    %36 = vector.load %arg2[%c0_47, %c1_48, %c0_49, %c1_50, %c0_51] : memref<1x9x2x9x8xf32, #tpu.memory_space<vmem>>, vector<1x8x1x8x8xf32>
    %37 = vector.shape_cast %36 : vector<1x8x1x8x8xf32> to vector<8x8x8xf32>
    %38 = vector.shape_cast %37 : vector<8x8x8xf32> to vector<64x8xf32>
    %c2_52 = arith.constant 2 : index
    %c1_53 = arith.constant 1 : index
    %c0_54 = arith.constant 0 : index
    %c0_55 = arith.constant 0 : index
    %39 = vector.load %arg3[%c2_52, %c1_53, %c0_54, %c0_55] : memref<3x2x8x4xf32, #tpu.memory_space<vmem>>, vector<1x1x8x4xf32>
    %40 = vector.shape_cast %39 : vector<1x1x8x4xf32> to vector<8x4xf32>
    %cst_56 = arith.constant dense<0.000000e+00> : vector<64x4xf32>
    %41 = tpu.matmul %38, %40, %cst_56 {dimension_numbers = #tpu.dot_dimension_numbers<[1], [0], [0], [1], [0, 0, 1, 1], [], []>} : vector<64x8xf32>, vector<8x4xf32>, vector<64x4xf32> -> vector<64x4xf32>
    %42 = arith.addf %35, %41 : vector<64x4xf32>
    %c0_57 = arith.constant 0 : index
    %c0_58 = arith.constant 0 : index
    %43 = vector.load %arg4[%c0_57, %c0_58] : memref<1x4xf32, #tpu.memory_space<vmem>>, vector<1x4xf32>
    %44 = vector.broadcast %43 : vector<1x4xf32> to vector<64x4xf32>
    %45 = arith.addf %42, %44 : vector<64x4xf32>
    %c0_59 = arith.constant 0 : index
    %c0_60 = arith.constant 0 : index
    %c0_61 = arith.constant 0 : index
    %46 = vector.load %arg5[%c0_59, %c0_60, %c0_61] : memref<1x64x4xf32, #tpu.memory_space<vmem>>, vector<1x64x4xf32>
    %47 = vector.shape_cast %46 : vector<1x64x4xf32> to vector<64x4xf32>
    %48 = vector.shape_cast %45 : vector<64x4xf32> to vector<1x64x4xf32>
    tpu.vector_store %arg5[%c0_59, %c0_60, %c0_61], %48 {strides = array<i32>} : memref<1x64x4xf32, #tpu.memory_space<vmem>>, vector<1x64x4xf32>,
    return
  }
  func.func @transform_0(%arg0: i32, %arg1: i32) -> (i32, i32, i32, i32, i32) {
    %c0_i32 = arith.constant 0 : i32
    %c0_i32_0 = arith.constant 0 : i32
    %c0_i32_1 = arith.constant 0 : i32
    %c0_i32_2 = arith.constant 0 : i32
    %c0_i32_3 = arith.constant 0 : i32
    return %arg0, %c0_i32, %c0_i32_0, %c0_i32_1, %c0_i32_2 : i32, i32, i32, i32, i32
  }
  func.func @transform_1(%arg0: i32, %arg1: i32) -> (i32, i32, i32, i32) {
    %c0_i32 = arith.constant 0 : i32
    %c0_i32_0 = arith.constant 0 : i32
    %c0_i32_1 = arith.constant 0 : i32
    %c0_i32_2 = arith.constant 0 : i32
    return %c0_i32, %c0_i32_0, %c0_i32_1, %arg1 : i32, i32, i32, i32
  }
  func.func @transform_2(%arg0: i32, %arg1: i32) -> (i32, i32) {
    %c0_i32 = arith.constant 0 : i32
    %c0_i32_0 = arith.constant 0 : i32
    return %c0_i32, %arg1 : i32, i32
  }
  func.func @transform_3(%arg0: i32, %arg1: i32) -> (i32, i32, i32) {
    %c0_i32 = arith.constant 0 : i32
    %c0_i32_0 = arith.constant 0 : i32
    return %arg0, %c0_i32, %arg1 : i32, i32, i32
  }
}

</mosaic_0001>

<llo_original>
// kernel: tpu_custom_call.1
$region0: #{tpu_custom_call.1}
  #allocation0 [shape = 'u32[]', space=smem, size = 0x4, offset = 0x4, fixed_abs, tag = 'smem constant byte address 0x4 - core index']
  #allocation1 [shape = 'u32[144,128]{1,0:T(1,128)}', space=vmem, size = 0x12000, scoped, tag = 'internal scratch']
  %s0 = inlined_call_operand.vmem [shape: f32[2,9,2,9,8], index: 0, kind: input, shape index: {}]
  %s1 = inlined_call_operand.vmem [shape: f32[3,2,8,4], index: 1, kind: input, shape index: {}]
  %s2 = inlined_call_operand.vmem [shape: f32[1,4], index: 2, kind: input, shape index: {}]
  %s3 = inlined_call_operand.vmem [shape: f32[2,64,4], index: 3, kind: output, shape index: {}]
  %s4 = sld [smem:[#allocation0]]
  $region45: #{tpu_custom_call.1} parent=0
    _
  %s6 = ssub.s32 1, %s4
  %s7 = scalar_select 0, %s6, %s4
  loop: start=0, step=1, limit=4
  $region2: #{tpu_custom_call.1} parent=0 // loop_pre_header
    _
  $region3: #{tpu_custom_call.1} parent=0 // loop_header
    %s9 = sphi 0, %s13
    %p10 = scmp.ge.s32.totalorder %s9, 4
    %s16 = sphi 0, %s28
    %s17 = sphi 0, %s24
    %s18 = sphi 0, %s16
    %s19 = sphi 0, %s17
    %s20 = sphi 0, %s18
    %s21 = sphi 0, %s19
    %s31 = sphi 0, %s33
    %s34 = sphi 0, %s31
    %s35 = sphi 0, %s34
    %s51 = sphi 0, %s35
    %s57 = sphi 0, %s59
    %s60 = sphi 0, %s57
    %s61 = sphi 0, %s60
    %s77 = sphi 0, %s61
    %s83 = sphi 0, %s85
    %s86 = sphi 0, %s83
    %s87 = sphi 0, %s86
    %s103 = sphi 0, %s87
    %s111 = sphi 0, %s113
    %s114 = sphi 0, %s111
    %s115 = sphi 0, %s114
    %s131 = sphi 0, %s115
  $region4: #{tpu_custom_call.1} parent=0 // loop_header_branch
    %12 = sbr.rel (%p10) target = $region8
  $region5: #{tpu_custom_call.1} parent=0 // loop_body
    %s14 = ssub.s32 %s9, 1
    %s15 = ssub.s32 %s9, 2
    %s22 = sadd.s32 1, %s17
    %p23 = scmp.ge.s32.totalorder %s22, 1
    %s24 = scalar_select %p23, 0, %s22
    %s25 = sadd.s32 1, %s16
    %s26 = scalar_select %p23, %s25, %s16
    %p27 = scmp.ge.s32.totalorder %s26, 2
    %s28 = scalar_select %p27, 0, %s26
    %s29 = ssub.s32 %s16, %s28
    %p30 = scmp.eq.s32.totalorder %s29, 0
    %s32 = sadd.s32 %s31, 1
    %s33 = scalar_select %p30, %s31, %s32
    %p36 = pneg %p30
    %p37 = scmp.eq.s32.totalorder %s9, 1
    %p38 = por %p36, %p37
    %p39 = scmp.ne.s32.totalorder %s31, %s34
    %p40 = scmp.eq.s32.totalorder %s9, 0
    %p41 = por %p39, %p40
    %p42 = scmp.ne.s32.totalorder %s31, %s34
    %p43 = scmp.eq.s32.totalorder %s14, 1
    %p44 = por %p42, %p43
    %p45 = scmp.ne.s32.totalorder %s34, %s35
    %p46 = scmp.eq.s32.totalorder %s14, 0
    %p47 = por %p45, %p46
    %p48 = scmp.ne.s32.totalorder %s34, %s35
    %p49 = scmp.eq.s32.totalorder %s15, 1
    %p50 = por %p48, %p49
    %p52 = scmp.ne.s32.totalorder %s35, %s51
    %p53 = scmp.eq.s32.totalorder %s15, 0
    %p54 = por %p52, %p53
    %s55 = ssub.s32 %s17, %s24
    %p56 = scmp.eq.s32.totalorder %s55, 0
    %s58 = sadd.s32 %s57, 1
    %s59 = scalar_select %p56, %s57, %s58
    %p62 = pneg %p56
    %p63 = scmp.eq.s32.totalorder %s9, 1
    %p64 = por %p62, %p63
    %p65 = scmp.ne.s32.totalorder %s57, %s60
    %p66 = scmp.eq.s32.totalorder %s9, 0
    %p67 = por %p65, %p66
    %p68 = scmp.ne.s32.totalorder %s57, %s60
    %p69 = scmp.eq.s32.totalorder %s14, 1
    %p70 = por %p68, %p69
    %p71 = scmp.ne.s32.totalorder %s60, %s61
    %p72 = scmp.eq.s32.totalorder %s14, 0
    %p73 = por %p71, %p72
    %p74 = scmp.ne.s32.totalorder %s60, %s61
    %p75 = scmp.eq.s32.totalorder %s15, 1
    %p76 = por %p74, %p75
    %p78 = scmp.ne.s32.totalorder %s61, %s77
    %p79 = scmp.eq.s32.totalorder %s15, 0
    %p80 = por %p78, %p79
    %s81 = ssub.s32 %s17, %s24
    %p82 = scmp.eq.s32.totalorder %s81, 0
    %s84 = sadd.s32 %s83, 1
    %s85 = scalar_select %p82, %s83, %s84
    %p88 = pneg %p82
    %p89 = scmp.eq.s32.totalorder %s9, 1
    %p90 = por %p88, %p89
    %p91 = scmp.ne.s32.totalorder %s83, %s86
    %p92 = scmp.eq.s32.totalorder %s9, 0
    %p93 = por %p91, %p92
    %p94 = scmp.ne.s32.totalorder %s83, %s86
    %p95 = scmp.eq.s32.totalorder %s14, 1
    %p96 = por %p94, %p95
    %p97 = scmp.ne.s32.totalorder %s86, %s87
    %p98 = scmp.eq.s32.totalorder %s14, 0
    %p99 = por %p97, %p98
    %p100 = scmp.ne.s32.totalorder %s86, %s87
    %p101 = scmp.eq.s32.totalorder %s15, 1
    %p102 = por %p100, %p101
    %p104 = scmp.ne.s32.totalorder %s87, %s103
    %p105 = scmp.eq.s32.totalorder %s15, 0
    %p106 = por %p104, %p105
    %s107 = ssub.s32 %s16, %s28
    %s108 = ssub.s32 %s17, %s24
    %s109 = sor.u32 %s107, %s108
    %p110 = scmp.eq.s32.totalorder %s109, 0
    %s112 = sadd.s32 %s111, 1
    %s113 = scalar_select %p110, %s111, %s112
    %p116 = pneg %p110
    %p117 = scmp.eq.s32.totalorder %s9, 1
    %p118 = por %p116, %p117
    %p119 = scmp.ne.s32.totalorder %s111, %s114
    %p120 = scmp.eq.s32.totalorder %s9, 0
    %p121 = por %p119, %p120
    %p122 = scmp.ne.s32.totalorder %s111, %s114
    %p123 = scmp.eq.s32.totalorder %s14, 1
    %p124 = por %p122, %p123
    %p125 = scmp.ne.s32.totalorder %s114, %s115
    %p126 = scmp.eq.s32.totalorder %s14, 0
    %p127 = por %p125, %p126
    %p128 = scmp.ne.s32.totalorder %s114, %s115
    %p129 = scmp.eq.s32.totalorder %s15, 1
    %p130 = por %p128, %p129
    %p132 = scmp.ne.s32.totalorder %s115, %s131
    %p133 = scmp.eq.s32.totalorder %s15, 0
    %p134 = por %p132, %p133
    %p135 = scmp.le.s32.totalorder 1, %s9
    %p136 = scmp.lt.s32.totalorder %s9, 3
    %p137 = pnand %p135, %p136
    %p138 = pneg %p137
    // Predicated region
    $region9: #{tpu_custom_call.1} parent=5 // pred_check
      _
    $region10: #{tpu_custom_call.1} parent=5 // pred_check_branch
      %140 = sbr.rel (%p137) target = $region12
    $region11: #{tpu_custom_call.1} parent=5 // pred_region
      %s141 = ssub.s32 %s9, 1
      // Predicated region
      $region13: #{tpu_custom_call.1} parent=11 // pred_check
        %p142 = pneg %p73
      $region14: #{tpu_custom_call.1} parent=11 // pred_check_branch
        %144 = sbr.rel (%p142) target = $region16
      $region15: #{tpu_custom_call.1} parent=11 // pred_region
        %p145 = scmp.lt.s32.totalorder %s19, 0
        %s146 = scalar_select %p145, %s19, 0
        %s147 = smul.addr %s146, 8
        %s148 = scalar_lea.vmem %s1, %s147
      $region16: #{tpu_custom_call.1} parent=11 // pred_fallthru
        _
      // Predicated region
      $region17: #{tpu_custom_call.1} parent=11 // pred_check
        %p149 = pneg %p99
      $region18: #{tpu_custom_call.1} parent=11 // pred_check_branch
        %151 = sbr.rel (%p149) target = $region20
      $region19: #{tpu_custom_call.1} parent=11 // pred_region
        %p152 = scmp.lt.s32.totalorder %s19, 0
        %s153 = scalar_select %p152, %s19, 0
        %s154 = scalar_lea.vmem %s2, %s153
      $region20: #{tpu_custom_call.1} parent=11 // pred_fallthru
        _
    $region12: #{tpu_custom_call.1} parent=5 // pred_fallthru
      _
    %p155 = scmp.lt.s32.totalorder %s9, 2
    // Predicated region
    $region21: #{tpu_custom_call.1} parent=5 // pred_check
      %p156 = pneg %p155
    $region22: #{tpu_custom_call.1} parent=5 // pred_check_branch
      %158 = sbr.rel (%p156) target = $region24
    $region23: #{tpu_custom_call.1} parent=5 // pred_region
      // Predicated region
      $region25: #{tpu_custom_call.1} parent=23 // pred_check
        %p159 = pneg %p41
      $region26: #{tpu_custom_call.1} parent=23 // pred_check_branch
        %161 = sbr.rel (%p159) target = $region28
      $region27: #{tpu_custom_call.1} parent=23 // pred_region
        %p162 = scmp.lt.s32.totalorder %s16, 1
        %s163 = scalar_select %p162, %s16, 1
        %s164 = smul.addr %s163, 36
        %s165 = smul.addr %s164, 8
        %s166 = scalar_lea.vmem %s0, %s165
      $region28: #{tpu_custom_call.1} parent=23 // pred_fallthru
        _
    $region24: #{tpu_custom_call.1} parent=5 // pred_fallthru
      _
    %p167 = scmp.le.s32.totalorder 1, %s9
    %p168 = scmp.lt.s32.totalorder %s9, 3
    %p169 = pnand %p167, %p168
    %p170 = pneg %p169
    // Predicated region
    $region29: #{tpu_custom_call.1} parent=5 // pred_check
      _
    $region30: #{tpu_custom_call.1} parent=5 // pred_check_branch
      %172 = sbr.rel (%p169) target = $region32
    $region31: #{tpu_custom_call.1} parent=5 // pred_region
      %s173 = ssub.s32 %s9, 1
      %p174 = scmp.lt.s32.totalorder %s18, 1
      %s175 = scalar_select %p174, %s18, 1
      %s176 = smul.addr %s175, 36
      %s177 = smul.addr %s176, 8
      %s178 = scalar_lea.vmem %s0, %s177
      %p179 = pneg %p47
      %p180 = pneg %p44
      %p181 = scmp.lt.s32.totalorder %s19, 0
      %s182 = scalar_select %p181, %s19, 0
      %s183 = smul.addr %s182, 8
      %s184 = scalar_lea.vmem %s1, %s183
      %p185 = pneg %p73
      %p186 = pneg %p70
      %p187 = scmp.lt.s32.totalorder %s19, 0
      %s188 = scalar_select %p187, %s19, 0
      %s189 = scalar_lea.vmem %s2, %s188
      %p190 = pneg %p99
      %p191 = pneg %p96
      %p192 = pneg %p127
      %p193 = pneg %p124
      %p194 = scmp.lt.s32.totalorder %s18, 1
      %s195 = scalar_select %p194, %s18, 1
      %p196 = scmp.lt.s32.totalorder %s19, 0
      %s197 = scalar_select %p196, %s19, 0
      %s198 = smul.addr %s195, 8
      %s199 = sadd.s32 %s197, %s198
      %s200 = smul.addr %s199, 8
      %s201 = scalar_lea.vmem %s3, %s200
      %p202 = scmp.lt.s32.totalorder %s18, 1
      %s203 = scalar_select %p202, %s18, 1
      %s204 = smul.addr %s203, 36
      %s205 = smul.addr %s204, 8
      %s206 = scalar_lea.vmem %s0, %s205
      %p207 = scmp.lt.s32.totalorder %s19, 0
      %s208 = scalar_select %p207, %s19, 0
      %s209 = smul.addr %s208, 8
      %s210 = scalar_lea.vmem %s1, %s209
      %p211 = scmp.lt.s32.totalorder %s19, 0
      %s212 = scalar_select %p211, %s19, 0
      %s213 = scalar_lea.vmem %s2, %s212
      %p214 = scmp.lt.s32.totalorder %s18, 1
      %s215 = scalar_select %p214, %s18, 1
      %p216 = scmp.lt.s32.totalorder %s19, 0
      %s217 = scalar_select %p216, %s19, 0
      %s218 = smul.addr %s215, 8
      %s219 = sadd.s32 %s217, %s218
      %s220 = smul.addr %s219, 8
      %s221 = scalar_lea.vmem %s3, %s220
      %v222 = vld [vmem:[%s206] sm:$0xff]
      %v223 = vld [vmem:[%s206 + $0x20] sm:$0xff]
      %v224 = vld [vmem:[%s206 + $0x40] sm:$0xff]
      %v225 = vld [vmem:[%s206 + $0x60] sm:$0xff]
      %v226 = vld [vmem:[%s206 + $0x80] sm:$0xff]
      %v227 = vld [vmem:[%s206 + $0xa0] sm:$0xff]
      %v228 = vld [vmem:[%s206 + $0xc0] sm:$0xff]
      %v229 = vld [vmem:[%s206 + $0xe0] sm:$0xff]
      %v230 = vld [vmem:[%s210] sm:$0xff]
      %v231 = vld [vmem:[%s206 + $0x1] sm:$0xff]
      %v232 = vld [vmem:[%s206 + $0x21] sm:$0xff]
      %v233 = vld [vmem:[%s206 + $0x41] sm:$0xff]
      %v234 = vld [vmem:[%s206 + $0x61] sm:$0xff]
      %v235 = vld [vmem:[%s206 + $0x81] sm:$0xff]
      %v236 = vld [vmem:[%s206 + $0xa1] sm:$0xff]
      %v237 = vld [vmem:[%s206 + $0xc1] sm:$0xff]
      %v238 = vld [vmem:[%s206 + $0xe1] sm:$0xff]
      %s239 = scalar_lea.vmem %s210, 8
      %v240 = vld [vmem:[%s239] sm:$0xff]
      %vm241 = vcmask 64512
      %v243 = vsel %vm241, %v231, 0
      %v246 = vsel %vm241, %v232, 0
      %v249 = vsel %vm241, %v233, 0
      %v252 = vsel %vm241, %v234, 0
      %v255 = vsel %vm241, %v235, 0
      %v258 = vsel %vm241, %v236, 0
      %v261 = vsel %vm241, %v237, 0
      %v264 = vsel %vm241, %v238, 0
      %266 = vmatprep.subr.mxu0 0.0
      %267 = vmatpush1.msra.mxu0 %v240
      %268 = vmatprep.subr.mxu0 0.0
      %269 = vmatpush1.msra.mxu0 0.0
      %270 = vmatprep.subr.mxu0 0.0
      %271 = vmatpush1.msra.mxu0 0.0
      %272 = vmatprep.subr.mxu0 0.0
      %273 = vmatpush1.msra.mxu0 0.0
      %274 = vmatprep.subr.mxu0 0.0
      %275 = vmatpush1.msra.mxu0 0.0
      %276 = vmatprep.subr.mxu0 0.0
      %277 = vmatpush1.msra.mxu0 0.0
      %278 = vmatprep.subr.mxu0 0.0
      %279 = vmatpush1.msra.mxu0 0.0
      %280 = vmatprep.subr.mxu0 0.0
      %281 = vmatpush1.msra.mxu0 0.0
      %282 = vmatprep.subr.mxu0 0.0
      %283 = vmatpush1.msra.mxu0 0.0
      %284 = vmatprep.subr.mxu0 0.0
      %285 = vmatpush1.msra.mxu0 0.0
      %286 = vmatprep.subr.mxu0 0.0
      %287 = vmatpush1.msra.mxu0 0.0
      %288 = vmatprep.subr.mxu0 0.0
      %289 = vmatpush1.msra.mxu0 0.0
      %290 = vmatprep.subr.mxu0 0.0
      %291 = vmatpush1.msra.mxu0 0.0
      %292 = vmatprep.subr.mxu0 0.0
      %293 = vmatpush1.msra.mxu0 0.0
      %294 = vmatprep.subr.mxu0 0.0
      %295 = vmatpush1.msra.mxu0 0.0
      %296 = vmatprep.subr.mxu0 0.0
      %297 = vmatpush1.msra.mxu0 0.0
      %298 = vmatprep.subr.mxu0 0.0
      %299 = vmatpush1.msra.mxu0 0.0
      %300 = vmatprep.subr.mxu0 0.0
      %301 = vmatpush1.msra.mxu0 0.0
      %302 = vmatprep.subr.mxu0 0.0
      %303 = vmatpush1.msra.mxu0 0.0
      %304 = vmatprep.subr.mxu0 0.0
      %305 = vmatpush1.msra.mxu0 0.0
      %306 = vmatprep.subr.mxu0 0.0
      %307 = vmatpush1.msra.mxu0 0.0
      %308 = vmatprep.subr.mxu0 0.0
      %309 = vmatpush1.msra.mxu0 0.0
      %310 = vmatprep.subr.mxu0 0.0
      %311 = vmatpush1.msra.mxu0 0.0
      %312 = vmatprep.subr.mxu0 0.0
      %313 = vmatpush1.msra.mxu0 0.0
      %314 = vmatprep.subr.mxu0 0.0
      %315 = vmatpush1.msra.mxu0 0.0
      %316 = vmatprep.subr.mxu0 0.0
      %317 = vmatpush1.msra.mxu0 0.0
      %318 = vmatprep.subr.mxu0 0.0
      %319 = vmatpush1.msra.mxu0 0.0
      %320 = vmatprep.subr.mxu0 0.0
      %321 = vmatpush1.msra.mxu0 0.0
      %322 = vmatprep.subr.mxu0 0.0
      %323 = vmatpush1.msra.mxu0 0.0
      %324 = vmatprep.subr.mxu0 0.0
      %325 = vmatpush1.msra.mxu0 0.0
      %326 = vmatprep.subr.mxu0 0.0
      %327 = vmatpush1.msra.mxu0 0.0
      %328 = vmatprep.subr.mxu0 0.0
      %329 = vmatpush1.msra.mxu0 0.0
      %330 = vmatprep.mubr.f32.mxu0 0.0
      %331 = vmatmul.mubr.f32.gmra.mrb[0].mxu0 %v243
      %v332 = vpop.f32.mrb[0].mxu0
      %v333 = vadd.f32 0.0, %v332
      %v334 = vpop.f32.mrb[0].mxu0
      %335 = vmatprep.mubr.f32.mxu0 0.0
      %336 = vmatmul.mubr.f32.gmra.mrb[0].mxu0 %v246
      %v337 = vpop.f32.mrb[0].mxu0
      %v338 = vadd.f32 0.0, %v337
      %v339 = vpop.f32.mrb[0].mxu0
      %340 = vmatprep.mubr.f32.mxu0 0.0
      %341 = vmatmul.mubr.f32.gmra.mrb[0].mxu0 %v249
      %v342 = vpop.f32.mrb[0].mxu0
      %v343 = vadd.f32 0.0, %v342
      %v344 = vpop.f32.mrb[0].mxu0
      %345 = vmatprep.mubr.f32.mxu0 0.0
      %346 = vmatmul.mubr.f32.gmra.mrb[0].mxu0 %v252
      %v347 = vpop.f32.mrb[0].mxu0
      %v348 = vadd.f32 0.0, %v347
      %v349 = vpop.f32.mrb[0].mxu0
      %350 = vmatprep.mubr.f32.mxu0 0.0
      %351 = vmatmul.mubr.f32.gmra.mrb[0].mxu0 %v255
      %v352 = vpop.f32.mrb[0].mxu0
      %v353 = vadd.f32 0.0, %v352
      %v354 = vpop.f32.mrb[0].mxu0
      %355 = vmatprep.mubr.f32.mxu0 0.0
      %356 = vmatmul.mubr.f32.gmra.mrb[0].mxu0 %v258
      %v357 = vpop.f32.mrb[0].mxu0
      %v358 = vadd.f32 0.0, %v357
      %v359 = vpop.f32.mrb[0].mxu0
      %360 = vmatprep.mubr.f32.mxu0 0.0
      %361 = vmatmul.mubr.f32.gmra.mrb[0].mxu0 %v261
      %v362 = vpop.f32.mrb[0].mxu0
      %v363 = vadd.f32 0.0, %v362
      %v364 = vpop.f32.mrb[0].mxu0
      %365 = vmatprep.mubr.f32.mxu0 0.0
      %366 = vmatmul.mubr.f32.gmra.mrb[0].mxu0 %v264
      %v367 = vpop.f32.mrb[0].mxu0
      %v368 = vadd.f32 0.0, %v367
      %v369 = vpop.f32.mrb[0].mxu0
      %370 = vdwg.mxu0
      %v372 = vsel %vm241, %v222, 0
      %v375 = vsel %vm241, %v223, 0
      %v378 = vsel %vm241, %v224, 0
      %v381 = vsel %vm241, %v225, 0
      %v384 = vsel %vm241, %v226, 0
      %v387 = vsel %vm241, %v227, 0
      %v390 = vsel %vm241, %v228, 0
      %v393 = vsel %vm241, %v229, 0
      %395 = vmatprep.subr.mxu0 0.0
      %396 = vmatpush1.msra.mxu0 %v230
      %397 = vmatprep.subr.mxu0 0.0
      %398 = vmatpush1.msra.mxu0 0.0
      %399 = vmatprep.subr.mxu0 0.0
      %400 = vmatpush1.msra.mxu0 0.0
      %401 = vmatprep.subr.mxu0 0.0
      %402 = vmatpush1.msra.mxu0 0.0
      %403 = vmatprep.subr.mxu0 0.0
      %404 = vmatpush1.msra.mxu0 0.0
      %405 = vmatprep.subr.mxu0 0.0
      %406 = vmatpush1.msra.mxu0 0.0
      %407 = vmatprep.subr.mxu0 0.0
      %408 = vmatpush1.msra.mxu0 0.0
      %409 = vmatprep.subr.mxu0 0.0
      %410 = vmatpush1.msra.mxu0 0.0
      %411 = vmatprep.subr.mxu0 0.0
      %412 = vmatpush1.msra.mxu0 0.0
      %413 = vmatprep.subr.mxu0 0.0
      %414 = vmatpush1.msra.mxu0 0.0
      %415 = vmatprep.subr.mxu0 0.0
      %416 = vmatpush1.msra.mxu0 0.0
      %417 = vmatprep.subr.mxu0 0.0
      %418 = vmatpush1.msra.mxu0 0.0
      %419 = vmatprep.subr.mxu0 0.0
      %420 = vmatpush1.msra.mxu0 0.0
      %421 = vmatprep.subr.mxu0 0.0
      %422 = vmatpush1.msra.mxu0 0.0
      %423 = vmatprep.subr.mxu0 0.0
      %424 = vmatpush1.msra.mxu0 0.0
      %425 = vmatprep.subr.mxu0 0.0
      %426 = vmatpush1.msra.mxu0 0.0
      %427 = vmatprep.subr.mxu0 0.0
      %428 = vmatpush1.msra.mxu0 0.0
      %429 = vmatprep.subr.mxu0 0.0
      %430 = vmatpush1.msra.mxu0 0.0
      %431 = vmatprep.subr.mxu0 0.0
      %432 = vmatpush1.msra.mxu0 0.0
      %433 = vmatprep.subr.mxu0 0.0
      %434 = vmatpush1.msra.mxu0 0.0
      %435 = vmatprep.subr.mxu0 0.0
      %436 = vmatpush1.msra.mxu0 0.0
      %437 = vmatprep.subr.mxu0 0.0
      %438 = vmatpush1.msra.mxu0 0.0
      %439 = vmatprep.subr.mxu0 0.0
      %440 = vmatpush1.msra.mxu0 0.0
      %441 = vmatprep.subr.mxu0 0.0
      %442 = vmatpush1.msra.mxu0 0.0
      %443 = vmatprep.subr.mxu0 0.0
      %444 = vmatpush1.msra.mxu0 0.0
      %445 = vmatprep.subr.mxu0 0.0
      %446 = vmatpush1.msra.mxu0 0.0
      %447 = vmatprep.subr.mxu0 0.0
      %448 = vmatpush1.msra.mxu0 0.0
      %449 = vmatprep.subr.mxu0 0.0
      %450 = vmatpush1.msra.mxu0 0.0
      %451 = vmatprep.subr.mxu0 0.0
      %452 = vmatpush1.msra.mxu0 0.0
      %453 = vmatprep.subr.mxu0 0.0
      %454 = vmatpush1.msra.mxu0 0.0
      %455 = vmatprep.subr.mxu0 0.0
      %456 = vmatpush1.msra.mxu0 0.0
      %457 = vmatprep.subr.mxu0 0.0
      %458 = vmatpush1.msra.mxu0 0.0
      %459 = vmatprep.mubr.f32.mxu0 0.0
      %460 = vmatmul.mubr.f32.gmra.mrb[0].mxu0 %v372
      %v461 = vpop.f32.mrb[0].mxu0
      %v462 = vadd.f32 %v333, %v461
      %v463 = vpop.f32.mrb[0].mxu0
      %464 = vmatprep.mubr.f32.mxu0 0.0
      %465 = vmatmul.mubr.f32.gmra.mrb[0].mxu0 %v375
      %v466 = vpop.f32.mrb[0].mxu0
      %v467 = vadd.f32 %v338, %v466
      %v468 = vpop.f32.mrb[0].mxu0
      %469 = vmatprep.mubr.f32.mxu0 0.0
      %470 = vmatmul.mubr.f32.gmra.mrb[0].mxu0 %v378
      %v471 = vpop.f32.mrb[0].mxu0
      %v472 = vadd.f32 %v343, %v471
      %v473 = vpop.f32.mrb[0].mxu0
      %474 = vmatprep.mubr.f32.mxu0 0.0
      %475 = vmatmul.mubr.f32.gmra.mrb[0].mxu0 %v381
      %v476 = vpop.f32.mrb[0].mxu0
      %v477 = vadd.f32 %v348, %v476
      %v478 = vpop.f32.mrb[0].mxu0
      %479 = vmatprep.mubr.f32.mxu0 0.0
      %480 = vmatmul.mubr.f32.gmra.mrb[0].mxu0 %v384
      %v481 = vpop.f32.mrb[0].mxu0
      %v482 = vadd.f32 %v353, %v481
      %v483 = vpop.f32.mrb[0].mxu0
      %484 = vmatprep.mubr.f32.mxu0 0.0
      %485 = vmatmul.mubr.f32.gmra.mrb[0].mxu0 %v387
      %v486 = vpop.f32.mrb[0].mxu0
      %v487 = vadd.f32 %v358, %v486
      %v488 = vpop.f32.mrb[0].mxu0
      %489 = vmatprep.mubr.f32.mxu0 0.0
      %490 = vmatmul.mubr.f32.gmra.mrb[0].mxu0 %v390
      %v491 = vpop.f32.mrb[0].mxu0
      %v492 = vadd.f32 %v363, %v491
      %v493 = vpop.f32.mrb[0].mxu0
      %494 = vmatprep.mubr.f32.mxu0 0.0
      %495 = vmatmul.mubr.f32.gmra.mrb[0].mxu0 %v393
      %v496 = vpop.f32.mrb[0].mxu0
      %v497 = vadd.f32 %v368, %v496
      %v498 = vpop.f32.mrb[0].mxu0
      %499 = vdwg.mxu0
      %s500 = scalar_lea.vmem %s206, 16
      %v501 = vld [vmem:[%s500] sm:$0xff]
      %v502 = vld [vmem:[%s500 + $0x20] sm:$0xff]
      %v503 = vld [vmem:[%s500 + $0x40] sm:$0xff]
      %v504 = vld [vmem:[%s500 + $0x60] sm:$0xff]
      %v505 = vld [vmem:[%s500 + $0x80] sm:$0xff]
      %v506 = vld [vmem:[%s500 + $0xa0] sm:$0xff]
      %v507 = vld [vmem:[%s500 + $0xc0] sm:$0xff]
      %v508 = vld [vmem:[%s500 + $0xe0] sm:$0xff]
      %s509 = scalar_lea.vmem %s210, 16
      %v510 = vld [vmem:[%s509] sm:$0xff]
      %v512 = vsel %vm241, %v501, 0
      %v515 = vsel %vm241, %v502, 0
      %v518 = vsel %vm241, %v503, 0
      %v521 = vsel %vm241, %v504, 0
      %v524 = vsel %vm241, %v505, 0
      %v527 = vsel %vm241, %v506, 0
      %v530 = vsel %vm241, %v507, 0
      %v533 = vsel %vm241, %v508, 0
      %535 = vmatprep.subr.mxu0 0.0
      %536 = vmatpush1.msra.mxu0 %v510
      %537 = vmatprep.subr.mxu0 0.0
      %538 = vmatpush1.msra.mxu0 0.0
      %539 = vmatprep.subr.mxu0 0.0
      %540 = vmatpush1.msra.mxu0 0.0
      %541 = vmatprep.subr.mxu0 0.0
      %542 = vmatpush1.msra.mxu0 0.0
      %543 = vmatprep.subr.mxu0 0.0
      %544 = vmatpush1.msra.mxu0 0.0
      %545 = vmatprep.subr.mxu0 0.0
      %546 = vmatpush1.msra.mxu0 0.0
      %547 = vmatprep.subr.mxu0 0.0
      %548 = vmatpush1.msra.mxu0 0.0
      %549 = vmatprep.subr.mxu0 0.0
      %550 = vmatpush1.msra.mxu0 0.0
      %551 = vmatprep.subr.mxu0 0.0
      %552 = vmatpush1.msra.mxu0 0.0
      %553 = vmatprep.subr.mxu0 0.0
      %554 = vmatpush1.msra.mxu0 0.0
      %555 = vmatprep.subr.mxu0 0.0
      %556 = vmatpush1.msra.mxu0 0.0
      %557 = vmatprep.subr.mxu0 0.0
      %558 = vmatpush1.msra.mxu0 0.0
      %559 = vmatprep.subr.mxu0 0.0
      %560 = vmatpush1.msra.mxu0 0.0
      %561 = vmatprep.subr.mxu0 0.0
      %562 = vmatpush1.msra.mxu0 0.0
      %563 = vmatprep.subr.mxu0 0.0
      %564 = vmatpush1.msra.mxu0 0.0
      %565 = vmatprep.subr.mxu0 0.0
      %566 = vmatpush1.msra.mxu0 0.0
      %567 = vmatprep.subr.mxu0 0.0
      %568 = vmatpush1.msra.mxu0 0.0
      %569 = vmatprep.subr.mxu0 0.0
      %570 = vmatpush1.msra.mxu0 0.0
      %571 = vmatprep.subr.mxu0 0.0
      %572 = vmatpush1.msra.mxu0 0.0
      %573 = vmatprep.subr.mxu0 0.0
      %574 = vmatpush1.msra.mxu0 0.0
      %575 = vmatprep.subr.mxu0 0.0
      %576 = vmatpush1.msra.mxu0 0.0
      %577 = vmatprep.subr.mxu0 0.0
      %578 = vmatpush1.msra.mxu0 0.0
      %579 = vmatprep.subr.mxu0 0.0
      %580 = vmatpush1.msra.mxu0 0.0
      %581 = vmatprep.subr.mxu0 0.0
      %582 = vmatpush1.msra.mxu0 0.0
      %583 = vmatprep.subr.mxu0 0.0
      %584 = vmatpush1.msra.mxu0 0.0
      %585 = vmatprep.subr.mxu0 0.0
      %586 = vmatpush1.msra.mxu0 0.0
      %587 = vmatprep.subr.mxu0 0.0
      %588 = vmatpush1.msra.mxu0 0.0
      %589 = vmatprep.subr.mxu0 0.0
      %590 = vmatpush1.msra.mxu0 0.0
      %591 = vmatprep.subr.mxu0 0.0
      %592 = vmatpush1.msra.mxu0 0.0
      %593 = vmatprep.subr.mxu0 0.0
      %594 = vmatpush1.msra.mxu0 0.0
      %595 = vmatprep.subr.mxu0 0.0
      %596 = vmatpush1.msra.mxu0 0.0
      %597 = vmatprep.subr.mxu0 0.0
      %598 = vmatpush1.msra.mxu0 0.0
      %599 = vmatprep.mubr.f32.mxu0 0.0
      %600 = vmatmul.mubr.f32.gmra.mrb[0].mxu0 %v512
      %v601 = vpop.f32.mrb[0].mxu0
      %v602 = vadd.f32 0.0, %v601
      %v603 = vpop.f32.mrb[0].mxu0
      %604 = vmatprep.mubr.f32.mxu0 0.0
      %605 = vmatmul.mubr.f32.gmra.mrb[0].mxu0 %v515
      %v606 = vpop.f32.mrb[0].mxu0
      %v607 = vadd.f32 0.0, %v606
      %v608 = vpop.f32.mrb[0].mxu0
      %609 = vmatprep.mubr.f32.mxu0 0.0
      %610 = vmatmul.mubr.f32.gmra.mrb[0].mxu0 %v518
      %v611 = vpop.f32.mrb[0].mxu0
      %v612 = vadd.f32 0.0, %v611
      %v613 = vpop.f32.mrb[0].mxu0
      %614 = vmatprep.mubr.f32.mxu0 0.0
      %615 = vmatmul.mubr.f32.gmra.mrb[0].mxu0 %v521
      %v616 = vpop.f32.mrb[0].mxu0
      %v617 = vadd.f32 0.0, %v616
      %v618 = vpop.f32.mrb[0].mxu0
      %619 = vmatprep.mubr.f32.mxu0 0.0
      %620 = vmatmul.mubr.f32.gmra.mrb[0].mxu0 %v524
      %v621 = vpop.f32.mrb[0].mxu0
      %v622 = vadd.f32 0.0, %v621
      %v623 = vpop.f32.mrb[0].mxu0
      %624 = vmatprep.mubr.f32.mxu0 0.0
      %625 = vmatmul.mubr.f32.gmra.mrb[0].mxu0 %v527
      %v626 = vpop.f32.mrb[0].mxu0
      %v627 = vadd.f32 0.0, %v626
      %v628 = vpop.f32.mrb[0].mxu0
      %629 = vmatprep.mubr.f32.mxu0 0.0
      %630 = vmatmul.mubr.f32.gmra.mrb[0].mxu0 %v530
      %v631 = vpop.f32.mrb[0].mxu0
      %v632 = vadd.f32 0.0, %v631
      %v633 = vpop.f32.mrb[0].mxu0
      %634 = vmatprep.mubr.f32.mxu0 0.0
      %635 = vmatmul.mubr.f32.gmra.mrb[0].mxu0 %v533
      %v636 = vpop.f32.mrb[0].mxu0
      %v637 = vadd.f32 0.0, %v636
      %v638 = vpop.f32.mrb[0].mxu0
      %639 = vdwg.mxu0
      %v640 = vadd.f32 %v462, %v602
      %v641 = vadd.f32 %v467, %v607
      %v642 = vadd.f32 %v472, %v612
      %v643 = vadd.f32 %v477, %v617
      %v644 = vadd.f32 %v482, %v622
      %v645 = vadd.f32 %v487, %v627
      %v646 = vadd.f32 %v492, %v632
      %v647 = vadd.f32 %v497, %v637
      %v648 = vld [vmem:[%s500 + $0x1] sm:$0xff]
      %v649 = vld [vmem:[%s500 + $0x21] sm:$0xff]
      %v650 = vld [vmem:[%s500 + $0x41] sm:$0xff]
      %v651 = vld [vmem:[%s500 + $0x61] sm:$0xff]
      %v652 = vld [vmem:[%s500 + $0x81] sm:$0xff]
      %v653 = vld [vmem:[%s500 + $0xa1] sm:$0xff]
      %v654 = vld [vmem:[%s500 + $0xc1] sm:$0xff]
      %v655 = vld [vmem:[%s500 + $0xe1] sm:$0xff]
      %s656 = scalar_lea.vmem %s210, 24
      %v657 = vld [vmem:[%s656] sm:$0xff]
      %v659 = vsel %vm241, %v648, 0
      %v662 = vsel %vm241, %v649, 0
      %v665 = vsel %vm241, %v650, 0
      %v668 = vsel %vm241, %v651, 0
      %v671 = vsel %vm241, %v652, 0
      %v674 = vsel %vm241, %v653, 0
      %v677 = vsel %vm241, %v654, 0
      %v680 = vsel %vm241, %v655, 0
      %682 = vmatprep.subr.mxu0 0.0
      %683 = vmatpush1.msra.mxu0 %v657
      %684 = vmatprep.subr.mxu0 0.0
      %685 = vmatpush1.msra.mxu0 0.0
      %686 = vmatprep.subr.mxu0 0.0
      %687 = vmatpush1.msra.mxu0 0.0
      %688 = vmatprep.subr.mxu0 0.0
      %689 = vmatpush1.msra.mxu0 0.0
      %690 = vmatprep.subr.mxu0 0.0
      %691 = vmatpush1.msra.mxu0 0.0
      %692 = vmatprep.subr.mxu0 0.0
      %693 = vmatpush1.msra.mxu0 0.0
      %694 = vmatprep.subr.mxu0 0.0
      %695 = vmatpush1.msra.mxu0 0.0
      %696 = vmatprep.subr.mxu0 0.0
      %697 = vmatpush1.msra.mxu0 0.0
      %698 = vmatprep.subr.mxu0 0.0
      %699 = vmatpush1.msra.mxu0 0.0
      %700 = vmatprep.subr.mxu0 0.0
      %701 = vmatpush1.msra.mxu0 0.0
      %702 = vmatprep.subr.mxu0 0.0
      %703 = vmatpush1.msra.mxu0 0.0
      %704 = vmatprep.subr.mxu0 0.0
      %705 = vmatpush1.msra.mxu0 0.0
      %706 = vmatprep.subr.mxu0 0.0
      %707 = vmatpush1.msra.mxu0 0.0
      %708 = vmatprep.subr.mxu0 0.0
      %709 = vmatpush1.msra.mxu0 0.0
      %710 = vmatprep.subr.mxu0 0.0
      %711 = vmatpush1.msra.mxu0 0.0
      %712 = vmatprep.subr.mxu0 0.0
      %713 = vmatpush1.msra.mxu0 0.0
      %714 = vmatprep.subr.mxu0 0.0
      %715 = vmatpush1.msra.mxu0 0.0
      %716 = vmatprep.subr.mxu0 0.0
      %717 = vmatpush1.msra.mxu0 0.0
      %718 = vmatprep.subr.mxu0 0.0
      %719 = vmatpush1.msra.mxu0 0.0
      %720 = vmatprep.subr.mxu0 0.0
      %721 = vmatpush1.msra.mxu0 0.0
      %722 = vmatprep.subr.mxu0 0.0
      %723 = vmatpush1.msra.mxu0 0.0
      %724 = vmatprep.subr.mxu0 0.0
      %725 = vmatpush1.msra.mxu0 0.0
      %726 = vmatprep.subr.mxu0 0.0
      %727 = vmatpush1.msra.mxu0 0.0
      %728 = vmatprep.subr.mxu0 0.0
      %729 = vmatpush1.msra.mxu0 0.0
      %730 = vmatprep.subr.mxu0 0.0
      %731 = vmatpush1.msra.mxu0 0.0
      %732 = vmatprep.subr.mxu0 0.0
      %733 = vmatpush1.msra.mxu0 0.0
      %734 = vmatprep.subr.mxu0 0.0
      %735 = vmatpush1.msra.mxu0 0.0
      %736 = vmatprep.subr.mxu0 0.0
      %737 = vmatpush1.msra.mxu0 0.0
      %738 = vmatprep.subr.mxu0 0.0
      %739 = vmatpush1.msra.mxu0 0.0
      %740 = vmatprep.subr.mxu0 0.0
      %741 = vmatpush1.msra.mxu0 0.0
      %742 = vmatprep.subr.mxu0 0.0
      %743 = vmatpush1.msra.mxu0 0.0
      %744 = vmatprep.subr.mxu0 0.0
      %745 = vmatpush1.msra.mxu0 0.0
      %746 = vmatprep.mubr.f32.mxu0 0.0
      %747 = vmatmul.mubr.f32.gmra.mrb[0].mxu0 %v659
      %v748 = vpop.f32.mrb[0].mxu0
      %v749 = vadd.f32 0.0, %v748
      %v750 = vpop.f32.mrb[0].mxu0
      %751 = vmatprep.mubr.f32.mxu0 0.0
      %752 = vmatmul.mubr.f32.gmra.mrb[0].mxu0 %v662
      %v753 = vpop.f32.mrb[0].mxu0
      %v754 = vadd.f32 0.0, %v753
      %v755 = vpop.f32.mrb[0].mxu0
      %756 = vmatprep.mubr.f32.mxu0 0.0
      %757 = vmatmul.mubr.f32.gmra.mrb[0].mxu0 %v665
      %v758 = vpop.f32.mrb[0].mxu0
      %v759 = vadd.f32 0.0, %v758
      %v760 = vpop.f32.mrb[0].mxu0
      %761 = vmatprep.mubr.f32.mxu0 0.0
      %762 = vmatmul.mubr.f32.gmra.mrb[0].mxu0 %v668
      %v763 = vpop.f32.mrb[0].mxu0
      %v764 = vadd.f32 0.0, %v763
      %v765 = vpop.f32.mrb[0].mxu0
      %766 = vmatprep.mubr.f32.mxu0 0.0
      %767 = vmatmul.mubr.f32.gmra.mrb[0].mxu0 %v671
      %v768 = vpop.f32.mrb[0].mxu0
      %v769 = vadd.f32 0.0, %v768
      %v770 = vpop.f32.mrb[0].mxu0
      %771 = vmatprep.mubr.f32.mxu0 0.0
      %772 = vmatmul.mubr.f32.gmra.mrb[0].mxu0 %v674
      %v773 = vpop.f32.mrb[0].mxu0
      %v774 = vadd.f32 0.0, %v773
      %v775 = vpop.f32.mrb[0].mxu0
      %776 = vmatprep.mubr.f32.mxu0 0.0
      %777 = vmatmul.mubr.f32.gmra.mrb[0].mxu0 %v677
      %v778 = vpop.f32.mrb[0].mxu0
      %v779 = vadd.f32 0.0, %v778
      %v780 = vpop.f32.mrb[0].mxu0
      %781 = vmatprep.mubr.f32.mxu0 0.0
      %782 = vmatmul.mubr.f32.gmra.mrb[0].mxu0 %v680
      %v783 = vpop.f32.mrb[0].mxu0
      %v784 = vadd.f32 0.0, %v783
      %v785 = vpop.f32.mrb[0].mxu0
      %786 = vdwg.mxu0
      %v787 = vadd.f32 %v640, %v749
      %v788 = vadd.f32 %v641, %v754
      %v789 = vadd.f32 %v642, %v759
      %v790 = vadd.f32 %v643, %v764
      %v791 = vadd.f32 %v644, %v769
      %v792 = vadd.f32 %v645, %v774
      %v793 = vadd.f32 %v646, %v779
      %v794 = vadd.f32 %v647, %v784
      %s795 = scalar_lea.vmem %s206, 32
      %v796 = vld [vmem:[%s795] sm:$0xff]
      %v797 = vld [vmem:[%s795 + $0x20] sm:$0xff]
      %v798 = vld [vmem:[%s795 + $0x40] sm:$0xff]
      %v799 = vld [vmem:[%s795 + $0x60] sm:$0xff]
      %v800 = vld [vmem:[%s795 + $0x80] sm:$0xff]
      %v801 = vld [vmem:[%s795 + $0xa0] sm:$0xff]
      %v802 = vld [vmem:[%s795 + $0xc0] sm:$0xff]
      %v803 = vld [vmem:[%s795 + $0xe0] sm:$0xff]
      %s804 = scalar_lea.vmem %s210, 32
      %v805 = vld [vmem:[%s804] sm:$0xff]
      %v807 = vsel %vm241, %v796, 0
      %v810 = vsel %vm241, %v797, 0
      %v813 = vsel %vm241, %v798, 0
      %v816 = vsel %vm241, %v799, 0
      %v819 = vsel %vm241, %v800, 0
      %v822 = vsel %vm241, %v801, 0
      %v825 = vsel %vm241, %v802, 0
      %v828 = vsel %vm241, %v803, 0
      %830 = vmatprep.subr.mxu0 0.0
      %831 = vmatpush1.msra.mxu0 %v805
      %832 = vmatprep.subr.mxu0 0.0
      %833 = vmatpush1.msra.mxu0 0.0
      %834 = vmatprep.subr.mxu0 0.0
      %835 = vmatpush1.msra.mxu0 0.0
      %836 = vmatprep.subr.mxu0 0.0
      %837 = vmatpush1.msra.mxu0 0.0
      %838 = vmatprep.subr.mxu0 0.0
      %839 = vmatpush1.msra.mxu0 0.0
      %840 = vmatprep.subr.mxu0 0.0
      %841 = vmatpush1.msra.mxu0 0.0
      %842 = vmatprep.subr.mxu0 0.0
      %843 = vmatpush1.msra.mxu0 0.0
      %844 = vmatprep.subr.mxu0 0.0
      %845 = vmatpush1.msra.mxu0 0.0
      %846 = vmatprep.subr.mxu0 0.0
      %847 = vmatpush1.msra.mxu0 0.0
      %848 = vmatprep.subr.mxu0 0.0
      %849 = vmatpush1.msra.mxu0 0.0
      %850 = vmatprep.subr.mxu0 0.0
      %851 = vmatpush1.msra.mxu0 0.0
      %852 = vmatprep.subr.mxu0 0.0
      %853 = vmatpush1.msra.mxu0 0.0
      %854 = vmatprep.subr.mxu0 0.0
      %855 = vmatpush1.msra.mxu0 0.0
      %856 = vmatprep.subr.mxu0 0.0
      %857 = vmatpush1.msra.mxu0 0.0
      %858 = vmatprep.subr.mxu0 0.0
      %859 = vmatpush1.msra.mxu0 0.0
      %860 = vmatprep.subr.mxu0 0.0
      %861 = vmatpush1.msra.mxu0 0.0
      %862 = vmatprep.subr.mxu0 0.0
      %863 = vmatpush1.msra.mxu0 0.0
      %864 = vmatprep.subr.mxu0 0.0
      %865 = vmatpush1.msra.mxu0 0.0
      %866 = vmatprep.subr.mxu0 0.0
      %867 = vmatpush1.msra.mxu0 0.0
      %868 = vmatprep.subr.mxu0 0.0
      %869 = vmatpush1.msra.mxu0 0.0
      %870 = vmatprep.subr.mxu0 0.0
      %871 = vmatpush1.msra.mxu0 0.0
      %872 = vmatprep.subr.mxu0 0.0
      %873 = vmatpush1.msra.mxu0 0.0
      %874 = vmatprep.subr.mxu0 0.0
      %875 = vmatpush1.msra.mxu0 0.0
      %876 = vmatprep.subr.mxu0 0.0
      %877 = vmatpush1.msra.mxu0 0.0
      %878 = vmatprep.subr.mxu0 0.0
      %879 = vmatpush1.msra.mxu0 0.0
      %880 = vmatprep.subr.mxu0 0.0
      %881 = vmatpush1.msra.mxu0 0.0
      %882 = vmatprep.subr.mxu0 0.0
      %883 = vmatpush1.msra.mxu0 0.0
      %884 = vmatprep.subr.mxu0 0.0
      %885 = vmatpush1.msra.mxu0 0.0
      %886 = vmatprep.subr.mxu0 0.0
      %887 = vmatpush1.msra.mxu0 0.0
      %888 = vmatprep.subr.mxu0 0.0
      %889 = vmatpush1.msra.mxu0 0.0
      %890 = vmatprep.subr.mxu0 0.0
      %891 = vmatpush1.msra.mxu0 0.0
      %892 = vmatprep.subr.mxu0 0.0
      %893 = vmatpush1.msra.mxu0 0.0
      %894 = vmatprep.mubr.f32.mxu0 0.0
      %895 = vmatmul.mubr.f32.gmra.mrb[0].mxu0 %v807
      %v896 = vpop.f32.mrb[0].mxu0
      %v897 = vadd.f32 0.0, %v896
      %v898 = vpop.f32.mrb[0].mxu0
      %899 = vmatprep.mubr.f32.mxu0 0.0
      %900 = vmatmul.mubr.f32.gmra.mrb[0].mxu0 %v810
      %v901 = vpop.f32.mrb[0].mxu0
      %v902 = vadd.f32 0.0, %v901
      %v903 = vpop.f32.mrb[0].mxu0
      %904 = vmatprep.mubr.f32.mxu0 0.0
      %905 = vmatmul.mubr.f32.gmra.mrb[0].mxu0 %v813
      %v906 = vpop.f32.mrb[0].mxu0
      %v907 = vadd.f32 0.0, %v906
      %v908 = vpop.f32.mrb[0].mxu0
      %909 = vmatprep.mubr.f32.mxu0 0.0
      %910 = vmatmul.mubr.f32.gmra.mrb[0].mxu0 %v816
      %v911 = vpop.f32.mrb[0].mxu0
      %v912 = vadd.f32 0.0, %v911
      %v913 = vpop.f32.mrb[0].mxu0
      %914 = vmatprep.mubr.f32.mxu0 0.0
      %915 = vmatmul.mubr.f32.gmra.mrb[0].mxu0 %v819
      %v916 = vpop.f32.mrb[0].mxu0
      %v917 = vadd.f32 0.0, %v916
      %v918 = vpop.f32.mrb[0].mxu0
      %919 = vmatprep.mubr.f32.mxu0 0.0
      %920 = vmatmul.mubr.f32.gmra.mrb[0].mxu0 %v822
      %v921 = vpop.f32.mrb[0].mxu0
      %v922 = vadd.f32 0.0, %v921
      %v923 = vpop.f32.mrb[0].mxu0
      %924 = vmatprep.mubr.f32.mxu0 0.0
      %925 = vmatmul.mubr.f32.gmra.mrb[0].mxu0 %v825
      %v926 = vpop.f32.mrb[0].mxu0
      %v927 = vadd.f32 0.0, %v926
      %v928 = vpop.f32.mrb[0].mxu0
      %929 = vmatprep.mubr.f32.mxu0 0.0
      %930 = vmatmul.mubr.f32.gmra.mrb[0].mxu0 %v828
      %v931 = vpop.f32.mrb[0].mxu0
      %v932 = vadd.f32 0.0, %v931
      %v933 = vpop.f32.mrb[0].mxu0
      %934 = vdwg.mxu0
      %v935 = vadd.f32 %v787, %v897
      %v936 = vadd.f32 %v788, %v902
      %v937 = vadd.f32 %v789, %v907
      %v938 = vadd.f32 %v790, %v912
      %v939 = vadd.f32 %v791, %v917
      %v940 = vadd.f32 %v792, %v922
      %v941 = vadd.f32 %v793, %v927
      %v942 = vadd.f32 %v794, %v932
      %v943 = vld [vmem:[%s795 + $0x1] sm:$0xff]
      %v944 = vld [vmem:[%s795 + $0x21] sm:$0xff]
      %v945 = vld [vmem:[%s795 + $0x41] sm:$0xff]
      %v946 = vld [vmem:[%s795 + $0x61] sm:$0xff]
      %v947 = vld [vmem:[%s795 + $0x81] sm:$0xff]
      %v948 = vld [vmem:[%s795 + $0xa1] sm:$0xff]
      %v949 = vld [vmem:[%s795 + $0xc1] sm:$0xff]
      %v950 = vld [vmem:[%s795 + $0xe1] sm:$0xff]
      %s951 = scalar_lea.vmem %s210, 40
      %v952 = vld [vmem:[%s951] sm:$0xff]
      %v954 = vsel %vm241, %v943, 0
      %v957 = vsel %vm241, %v944, 0
      %v960 = vsel %vm241, %v945, 0
      %v963 = vsel %vm241, %v946, 0
      %v966 = vsel %vm241, %v947, 0
      %v969 = vsel %vm241, %v948, 0
      %v972 = vsel %vm241, %v949, 0
      %v975 = vsel %vm241, %v950, 0
      %977 = vmatprep.subr.mxu0 0.0
      %978 = vmatpush1.msra.mxu0 %v952
      %979 = vmatprep.subr.mxu0 0.0
      %980 = vmatpush1.msra.mxu0 0.0
      %981 = vmatprep.subr.mxu0 0.0
      %982 = vmatpush1.msra.mxu0 0.0
      %983 = vmatprep.subr.mxu0 0.0
      %984 = vmatpush1.msra.mxu0 0.0
      %985 = vmatprep.subr.mxu0 0.0
      %986 = vmatpush1.msra.mxu0 0.0
      %987 = vmatprep.subr.mxu0 0.0
      %988 = vmatpush1.msra.mxu0 0.0
      %989 = vmatprep.subr.mxu0 0.0
      %990 = vmatpush1.msra.mxu0 0.0
      %991 = vmatprep.subr.mxu0 0.0
      %992 = vmatpush1.msra.mxu0 0.0
      %993 = vmatprep.subr.mxu0 0.0
      %994 = vmatpush1.msra.mxu0 0.0
      %995 = vmatprep.subr.mxu0 0.0
      %996 = vmatpush1.msra.mxu0 0.0
      %997 = vmatprep.subr.mxu0 0.0
      %998 = vmatpush1.msra.mxu0 0.0
      %999 = vmatprep.subr.mxu0 0.0
      %1000 = vmatpush1.msra.mxu0 0.0
      %1001 = vmatprep.subr.mxu0 0.0
      %1002 = vmatpush1.msra.mxu0 0.0
      %1003 = vmatprep.subr.mxu0 0.0
      %1004 = vmatpush1.msra.mxu0 0.0
      %1005 = vmatprep.subr.mxu0 0.0
      %1006 = vmatpush1.msra.mxu0 0.0
      %1007 = vmatprep.subr.mxu0 0.0
      %1008 = vmatpush1.msra.mxu0 0.0
      %1009 = vmatprep.subr.mxu0 0.0
      %1010 = vmatpush1.msra.mxu0 0.0
      %1011 = vmatprep.subr.mxu0 0.0
      %1012 = vmatpush1.msra.mxu0 0.0
      %1013 = vmatprep.subr.mxu0 0.0
      %1014 = vmatpush1.msra.mxu0 0.0
      %1015 = vmatprep.subr.mxu0 0.0
      %1016 = vmatpush1.msra.mxu0 0.0
      %1017 = vmatprep.subr.mxu0 0.0
      %1018 = vmatpush1.msra.mxu0 0.0
      %1019 = vmatprep.subr.mxu0 0.0
      %1020 = vmatpush1.msra.mxu0 0.0
      %1021 = vmatprep.subr.mxu0 0.0
      %1022 = vmatpush1.msra.mxu0 0.0
      %1023 = vmatprep.subr.mxu0 0.0
      %1024 = vmatpush1.msra.mxu0 0.0
      %1025 = vmatprep.subr.mxu0 0.0
      %1026 = vmatpush1.msra.mxu0 0.0
      %1027 = vmatprep.subr.mxu0 0.0
      %1028 = vmatpush1.msra.mxu0 0.0
      %1029 = vmatprep.subr.mxu0 0.0
      %1030 = vmatpush1.msra.mxu0 0.0
      %1031 = vmatprep.subr.mxu0 0.0
      %1032 = vmatpush1.msra.mxu0 0.0
      %1033 = vmatprep.subr.mxu0 0.0
      %1034 = vmatpush1.msra.mxu0 0.0
      %1035 = vmatprep.subr.mxu0 0.0
      %1036 = vmatpush1.msra.mxu0 0.0
      %1037 = vmatprep.subr.mxu0 0.0
      %1038 = vmatpush1.msra.mxu0 0.0
      %1039 = vmatprep.subr.mxu0 0.0
      %1040 = vmatpush1.msra.mxu0 0.0
      %1041 = vmatprep.mubr.f32.mxu0 0.0
      %1042 = vmatmul.mubr.f32.gmra.mrb[0].mxu0 %v954
      %v1043 = vpop.f32.mrb[0].mxu0
      %v1044 = vadd.f32 0.0, %v1043
      %v1045 = vpop.f32.mrb[0].mxu0
      %1046 = vmatprep.mubr.f32.mxu0 0.0
      %1047 = vmatmul.mubr.f32.gmra.mrb[0].mxu0 %v957
      %v1048 = vpop.f32.mrb[0].mxu0
      %v1049 = vadd.f32 0.0, %v1048
      %v1050 = vpop.f32.mrb[0].mxu0
      %1051 = vmatprep.mubr.f32.mxu0 0.0
      %1052 = vmatmul.mubr.f32.gmra.mrb[0].mxu0 %v960
      %v1053 = vpop.f32.mrb[0].mxu0
      %v1054 = vadd.f32 0.0, %v1053
      %v1055 = vpop.f32.mrb[0].mxu0
      %1056 = vmatprep.mubr.f32.mxu0 0.0
      %1057 = vmatmul.mubr.f32.gmra.mrb[0].mxu0 %v963
      %v1058 = vpop.f32.mrb[0].mxu0
      %v1059 = vadd.f32 0.0, %v1058
      %v1060 = vpop.f32.mrb[0].mxu0
      %1061 = vmatprep.mubr.f32.mxu0 0.0
      %1062 = vmatmul.mubr.f32.gmra.mrb[0].mxu0 %v966
      %v1063 = vpop.f32.mrb[0].mxu0
      %v1064 = vadd.f32 0.0, %v1063
      %v1065 = vpop.f32.mrb[0].mxu0
      %1066 = vmatprep.mubr.f32.mxu0 0.0
      %1067 = vmatmul.mubr.f32.gmra.mrb[0].mxu0 %v969
      %v1068 = vpop.f32.mrb[0].mxu0
      %v1069 = vadd.f32 0.0, %v1068
      %v1070 = vpop.f32.mrb[0].mxu0
      %1071 = vmatprep.mubr.f32.mxu0 0.0
      %1072 = vmatmul.mubr.f32.gmra.mrb[0].mxu0 %v972
      %v1073 = vpop.f32.mrb[0].mxu0
      %v1074 = vadd.f32 0.0, %v1073
      %v1075 = vpop.f32.mrb[0].mxu0
      %1076 = vmatprep.mubr.f32.mxu0 0.0
      %1077 = vmatmul.mubr.f32.gmra.mrb[0].mxu0 %v975
      %v1078 = vpop.f32.mrb[0].mxu0
      %v1079 = vadd.f32 0.0, %v1078
      %v1080 = vpop.f32.mrb[0].mxu0
      %1081 = vdwg.mxu0
      %v1082 = vadd.f32 %v935, %v1044
      %v1083 = vadd.f32 %v936, %v1049
      %v1084 = vadd.f32 %v937, %v1054
      %v1085 = vadd.f32 %v938, %v1059
      %v1086 = vadd.f32 %v939, %v1064
      %v1087 = vadd.f32 %v940, %v1069
      %v1088 = vadd.f32 %v941, %v1074
      %v1089 = vadd.f32 %v942, %v1079
      %v1090 = vld [vmem:[%s213] sm:$0x1]
      %v1092 = vlaneseq
      %v1093 = vshrl.u32 %v1092, 7
      %v1094 = vsub.s32 0, %v1093
      %v1095 = vrot.slane %v1090, %v1094
      %v1097 = vadd.f32 %v1082, %v1095
      %v1098 = vadd.f32 %v1083, %v1095
      %v1099 = vadd.f32 %v1084, %v1095
      %v1100 = vadd.f32 %v1085, %v1095
      %v1101 = vadd.f32 %v1086, %v1095
      %v1102 = vadd.f32 %v1087, %v1095
      %v1103 = vadd.f32 %v1088, %v1095
      %v1104 = vadd.f32 %v1089, %v1095
      %vm1105 = vcmask 31744
      %1106 = vst.msk [vmem:[%s221] sm:$0xff] %vm1105, %v1097
      %1107 = vst.msk [vmem:[%s221 + $0x8] sm:$0xff] %vm1105, %v1098
      %1108 = vst.msk [vmem:[%s221 + $0x10] sm:$0xff] %vm1105, %v1099
      %1109 = vst.msk [vmem:[%s221 + $0x18] sm:$0xff] %vm1105, %v1100
      %1110 = vst.msk [vmem:[%s221 + $0x20] sm:$0xff] %vm1105, %v1101
      %1111 = vst.msk [vmem:[%s221 + $0x28] sm:$0xff] %vm1105, %v1102
      %1112 = vst.msk [vmem:[%s221 + $0x30] sm:$0xff] %vm1105, %v1103
      %1113 = vst.msk [vmem:[%s221 + $0x38] sm:$0xff] %vm1105, %v1104
      %p1114 = scmp.lt.s32.totalorder %s18, 1
      %s1115 = scalar_select %p1114, %s18, 1
      %p1116 = scmp.lt.s32.totalorder %s19, 0
      %s1117 = scalar_select %p1116, %s19, 0
      %s1118 = smul.addr %s1115, 8
      %s1119 = sadd.s32 %s1117, %s1118
      %s1120 = smul.addr %s1119, 8
      %s1121 = scalar_lea.vmem %s3, %s1120
      // Predicated region
      $region33: #{tpu_custom_call.1} parent=31 // pred_check
        %p1122 = pneg %p124
      $region34: #{tpu_custom_call.1} parent=31 // pred_check_branch
        %1124 = sbr.rel (%p1122) target = $region36
      $region35: #{tpu_custom_call.1} parent=31 // pred_region
        _
      $region36: #{tpu_custom_call.1} parent=31 // pred_fallthru
        _
    $region32: #{tpu_custom_call.1} parent=5 // pred_fallthru
      _
    %p1125 = scmp.le.s32.totalorder 2, %s9
    // Predicated region
    $region37: #{tpu_custom_call.1} parent=5 // pred_check
      %p1126 = pneg %p1125
    $region38: #{tpu_custom_call.1} parent=5 // pred_check_branch
      %1128 = sbr.rel (%p1126) target = $region40
    $region39: #{tpu_custom_call.1} parent=5 // pred_region
      %s1129 = ssub.s32 %s9, 2
      // Predicated region
      $region41: #{tpu_custom_call.1} parent=39 // pred_check
        %p1130 = pneg %p130
      $region42: #{tpu_custom_call.1} parent=39 // pred_check_branch
        %1132 = sbr.rel (%p1130) target = $region44
      $region43: #{tpu_custom_call.1} parent=39 // pred_region
        %p1133 = scmp.lt.s32.totalorder %s20, 1
        %s1134 = scalar_select %p1133, %s20, 1
        %p1135 = scmp.lt.s32.totalorder %s21, 0
        %s1136 = scalar_select %p1135, %s21, 0
        %s1137 = smul.addr %s1134, 8
        %s1138 = sadd.s32 %s1136, %s1137
        %s1139 = smul.addr %s1138, 8
        %s1140 = scalar_lea.vmem %s3, %s1139
      $region44: #{tpu_custom_call.1} parent=39 // pred_fallthru
        _
    $region40: #{tpu_custom_call.1} parent=5 // pred_fallthru
      _
  $region6: #{tpu_custom_call.1} parent=0 // loop_footer
    %s13 = sadd.s32 1, %s9
  $region7: #{tpu_custom_call.1} parent=0 // loop_footer_branch
    %8 = sbr.rel target = $region3
  $region8: #{tpu_custom_call.1} parent=0 // loop_exit
    _

</llo_original>
